<compile_context>
chip_gen: v7x
topology: tpu7x:2x2x1
jax: 0.10.0
libtpu: 0.0.40
codegen_flags: <defaults>
</compile_context>

<pallas_src>
import jax
import jax.numpy as jnp
from jax import lax
from jax.experimental import pallas as pl
from jax.experimental.pallas import tpu as pltpu

d_ff = 2048
d_model = 16       # == input_dim in the reference module
LN_EPS = 1e-5      # nn.LayerNorm default
_LANE = 128


def _cdiv(a, b):
    return -(-a // b)


def _round_up(a, b):
    return _cdiv(a, b) * b


def _ffn_kernel(xt_ref, w1t_ref, b1_ref, w2t_ref, b2_ref, g_ref, beta_ref,
                o_ref, yacc_ref):
    """One (d_model, tm) column tile: FFN + residual + LayerNorm (transposed layout)."""
    n_chunks = w1t_ref.shape[0]            # static: d_ff // tk_ff

    xt = xt_ref[...].astype(jnp.float32)   # (D, tm) — exact f32 residual
    xt_bf = xt.astype(jnp.bfloat16)        # bf16 MXU operand (hoisted once)

    yacc_ref[...] = jnp.zeros_like(yacc_ref)   # (D, tm) f32 accumulator for y^T

    @pl.loop(0, n_chunks)
    def _(c):
        w1c = w1t_ref[c]                   # (tk_ff, D)  bf16
        b1c = b1_ref[c]                    # (tk_ff, 1)  f32
        w2c = w2t_ref[c]                   # (D, tk_ff)  bf16
        # conv1 (1x1): h_chunk^T = W1_chunk^T @ x^T  (K = d_model = 16, intrinsic cost)
        h = jnp.dot(w1c, xt_bf, preferred_element_type=jnp.float32)   # (tk_ff, tm) f32
        h = jnp.maximum(h + b1c, 0.0).astype(jnp.bfloat16)
        # conv2 (1x1) partial: y^T += W2_chunk^T @ h_chunk^T
        #   contraction = tk_ff (long MXU stream), lane/N dim = tm (~full MXU util)
        yacc_ref[...] += jnp.dot(w2c, h, preferred_element_type=jnp.float32)

    y = yacc_ref[...] + b2_ref[...] + xt   # residual add (exact f32), (D, tm)

    # LayerNorm over d_model == axis 0 (16 sublanes); lanes stay fully dense.
    # Biased variance matches nn.LayerNorm.
    mean = jnp.mean(y, axis=0, keepdims=True)          # (1, tm)
    cent = y - mean
    var = jnp.mean(cent * cent, axis=0, keepdims=True)
    ynorm = cent * lax.rsqrt(var + LN_EPS)
    o_ref[...] = (ynorm * g_ref[...] + beta_ref[...]).astype(o_ref.dtype)


def _choose_tiling(M, tm_max):
    """Lane-dense tile (multiple of 128), clamped to the problem; prefer even steps."""
    tm = max(_LANE, min(_round_up(tm_max, _LANE), _round_up(M, _LANE)))
    steps = _cdiv(M, tm)
    if steps >= 2 and steps % 2 == 1:
        # v7x megacore: an odd step count leaves one TC idle for part of the
        # kernel.  Shrink tm so the count becomes even without adding a whole
        # extra tile of padded work.
        tm_even = _round_up(_cdiv(M, steps + 1), _LANE)
        steps_even = _cdiv(M, tm_even)
        if steps_even % 2 == 0:
            tm, steps = tm_even, steps_even
    return tm, steps


def poswise_ffn(x, w1, b1, w2, b2, gamma, beta, *, tm=2048, tk_ff=512):
    """Position-wise FFN + residual + LayerNorm.  x: (B, S, d_model)."""
    B, S, D = x.shape
    assert D == d_model
    assert d_ff % tk_ff == 0 and tk_ff % _LANE == 0
    M = B * S
    n_chunks = d_ff // tk_ff

    tm, steps = _choose_tiling(M, tm)
    M_pad = steps * tm

    # Lane-dense transposed activations: (D, M) so M is the lane / MXU-N dim.
    xt = x.reshape(M, D).T
    if M_pad != M:
        # Zero columns are independent, finite under LayerNorm, and sliced off.
        xt = jnp.pad(xt, ((0, 0), (0, M_pad - M)))

    # Weights once in bf16, pre-chunked along d_ff so the kernel only does
    # leading-axis (fully supported) dynamic indexing.
    w1t = jnp.asarray(w1, jnp.float32).T.astype(jnp.bfloat16)        # (d_ff, D)
    w1t = w1t.reshape(n_chunks, tk_ff, D)                            # (C, tk, D)
    w2t = jnp.asarray(w2, jnp.float32).T.astype(jnp.bfloat16)        # (D, d_ff)
    w2t = w2t.reshape(D, n_chunks, tk_ff).transpose(1, 0, 2)         # (C, D, tk)
    b1c = jnp.asarray(b1, jnp.float32).reshape(n_chunks, tk_ff, 1)   # (C, tk, 1)
    b2c = jnp.asarray(b2, jnp.float32).reshape(D, 1)
    g_c = jnp.asarray(gamma, jnp.float32).reshape(D, 1)
    be_c = jnp.asarray(beta, jnp.float32).reshape(D, 1)

    param_bytes = ((w1t.size + w2t.size) * 2
                   + (b1c.size + b2c.size + g_c.size + be_c.size) * 4)
    cost = pl.CostEstimate(
        flops=4 * M_pad * D * d_ff,          # two (M, D, d_ff)-sized matmuls
        transcendentals=M_pad,               # one rsqrt per position
        bytes_accessed=2 * M_pad * D * 4 + param_bytes,
    )

    out_t = pl.pallas_call(
        _ffn_kernel,
        out_shape=jax.ShapeDtypeStruct((D, M_pad), x.dtype),
        grid_spec=pltpu.PrefetchScalarGridSpec(
            num_scalar_prefetch=0,
            grid=(steps,),
            in_specs=[
                pl.BlockSpec((D, tm), lambda i: (0, i)),              # x^T tile (lane-dense)
                pl.BlockSpec((n_chunks, tk_ff, D), lambda i: (0, 0, 0)),   # W1^T chunks (bf16)
                pl.BlockSpec((n_chunks, tk_ff, 1), lambda i: (0, 0, 0)),   # b1 chunks
                pl.BlockSpec((n_chunks, D, tk_ff), lambda i: (0, 0, 0)),   # W2^T chunks (bf16)
                pl.BlockSpec((D, 1), lambda i: (0, 0)),               # b2
                pl.BlockSpec((D, 1), lambda i: (0, 0)),               # gamma
                pl.BlockSpec((D, 1), lambda i: (0, 0)),               # beta
            ],
            out_specs=pl.BlockSpec((D, tm), lambda i: (0, i)),
            scratch_shapes=[pltpu.VMEM((D, tm), jnp.float32)],        # y^T accumulator
        ),
        compiler_params=pltpu.CompilerParams(
            dimension_semantics=("parallel",),
            vmem_limit_bytes=48 * 1024 * 1024,
        ),
        cost_estimate=cost,
    )(xt, w1t, b1c, w2t, b2c, g_c, be_c)

    if M_pad != M:
        out_t = out_t[:, :M]
    return out_t.T.reshape(B, S, D)


def _reference_f32(x, w1, b1, w2, b2, gamma, beta):
    # Pure-f32 JAX reference mirroring the PyTorch forward.
    xf = x.astype(jnp.float32)
    h = jnp.maximum(jnp.dot(xf, w1) + b1, 0.0)
    y = jnp.dot(h, w2) + b2 + xf
    mean = jnp.mean(y, axis=-1, keepdims=True)
    var = jnp.mean((y - mean) ** 2, axis=-1, keepdims=True)
    return ((y - mean) * lax.rsqrt(var + LN_EPS)) * gamma + beta


def _reference_mixed(x, w1, b1, w2, b2, gamma, beta):
    # Reference mirroring the kernel's mixed precision (bf16 matmul operands,
    # f32 accumulation, f32 residual/LayerNorm).
    xf = x.astype(jnp.float32)
    h = jnp.dot(xf.astype(jnp.bfloat16), w1.astype(jnp.bfloat16),
                preferred_element_type=jnp.float32)
    h = jnp.maximum(h + b1, 0.0)
    y = jnp.dot(h.astype(jnp.bfloat16), w2.astype(jnp.bfloat16),
                preferred_element_type=jnp.float32)
    y = y + b2 + xf
    mean = jnp.mean(y, axis=-1, keepdims=True)
    var = jnp.mean((y - mean) ** 2, axis=-1, keepdims=True)
    return ((y - mean) * lax.rsqrt(var + LN_EPS)) * gamma + beta


if __name__ == "__main__":
    key = jax.random.PRNGKey(0)
    k_x, k_x2, k_x3, k_w1, k_b1, k_w2, k_b2 = jax.random.split(key, 7)

    # Deterministic parameter init (shapes from nn.Conv1d / nn.LayerNorm).
    # conv1.weight: (d_ff, d_model, 1) -> W1: (d_model, d_ff)
    bound1 = 1.0 / (d_model ** 0.5)
    w1 = jax.random.uniform(k_w1, (d_model, d_ff), jnp.float32, -bound1, bound1)
    b1 = jax.random.uniform(k_b1, (d_ff,), jnp.float32, -bound1, bound1)
    # conv2.weight: (d_model, d_ff, 1) -> W2: (d_ff, d_model)
    bound2 = 1.0 / (d_ff ** 0.5)
    w2 = jax.random.uniform(k_w2, (d_ff, d_model), jnp.float32, -bound2, bound2)
    b2 = jax.random.uniform(k_b2, (d_model,), jnp.float32, -bound2, bound2)
    # LayerNorm affine params (default init: weight=1, bias=0)
    gamma = jnp.ones((d_model,), jnp.float32)
    beta = jnp.zeros((d_model,), jnp.float32)

    # Case 1: small canonical shape (single grid step, heavy lane padding).
    x_a = jax.random.normal(k_x, (2, 8, d_model), dtype=jnp.float32)
    # Case 2: odd shape exercising the cdiv / zero-pad / slice tail path.
    x_b = jax.random.normal(k_x2, (3, 37, d_model), dtype=jnp.float32)
    # Case 3: forces multiple (even) grid steps with a partial last tile.
    x_c = jax.random.normal(k_x3, (4, 200, d_model), dtype=jnp.float32)

    cases = [(x_a, {}), (x_b, {}), (x_c, {"tm": 256})]
    for x, kwargs in cases:
        out = poswise_ffn(x, w1, b1, w2, b2, gamma, beta, **kwargs)
        jax.block_until_ready(out)
        assert out.shape == x.shape
        assert bool(jnp.all(jnp.isfinite(out)))

        # Loose check vs the all-f32 PyTorch-equivalent reference (bf16 matmul
        # operands inside the kernel cost a few 1e-3 absolute on O(1) outputs).
        ref32 = _reference_f32(x, w1, b1, w2, b2, gamma, beta)
        err32 = float(jnp.max(jnp.abs(out - ref32)))
        assert err32 < 3e-2, f"mismatch vs f32 reference: {err32}"

        # Tighter check vs a reference with the same mixed precision
        # (accumulation order differs slightly due to d_ff chunking).
        refmx = _reference_mixed(x, w1, b1, w2, b2, gamma, beta)
        errmx = float(jnp.max(jnp.abs(out - refmx)))
        assert errmx < 5e-3, f"mismatch vs mixed reference: {errmx}"

    print("KERNEL_OK")
</pallas_src>

<mosaic_0001>
module attributes {stable_mosaic.version = 11 : i64} {
  func.func @_ffn_kernel(%arg0: i32, %arg1: memref<16x128xf32, #tpu.memory_space<vmem>>, %arg2: memref<4x512x16xbf16, #tpu.memory_space<vmem>>, %arg3: memref<4x512x1xf32, #tpu.memory_space<vmem>>, %arg4: memref<4x16x512xbf16, #tpu.memory_space<vmem>>, %arg5: memref<16x1xf32, #tpu.memory_space<vmem>>, %arg6: memref<16x1xf32, #tpu.memory_space<vmem>>, %arg7: memref<16x1xf32, #tpu.memory_space<vmem>>, %arg8: memref<16x128xf32, #tpu.memory_space<vmem>>, %arg9: memref<16x128xf32, #tpu.memory_space<vmem>>) attributes {dimension_semantics = [#tpu.dimension_semantics<parallel>], iteration_bounds = array<i64: 1>, scalar_prefetch = 0 : i64, scratch_operands = 1 : i64, tpu.core_type = #tpu.core_type<tc>, window_params = [{transform_indices = @transform_0, window_bounds = array<i64: 16, 128>}, {pipeline_mode = #tpu.pipeline_mode<synchronous>, transform_indices = @transform_1, window_bounds = array<i64: 4, 512, 16>}, {pipeline_mode = #tpu.pipeline_mode<synchronous>, transform_indices = @transform_2, window_bounds = array<i64: 4, 512, 1>}, {pipeline_mode = #tpu.pipeline_mode<synchronous>, transform_indices = @transform_3, window_bounds = array<i64: 4, 16, 512>}, {pipeline_mode = #tpu.pipeline_mode<synchronous>, transform_indices = @transform_4, window_bounds = array<i64: 16, 1>}, {pipeline_mode = #tpu.pipeline_mode<synchronous>, transform_indices = @transform_5, window_bounds = array<i64: 16, 1>}, {pipeline_mode = #tpu.pipeline_mode<synchronous>, transform_indices = @transform_6, window_bounds = array<i64: 16, 1>}, {transform_indices = @transform_7, window_bounds = array<i64: 16, 128>}]} {
    %c0 = arith.constant 0 : index
    %c0_0 = arith.constant 0 : index
    %0 = vector.load %arg1[%c0, %c0_0] : memref<16x128xf32, #tpu.memory_space<vmem>>, vector<16x128xf32>
    %1 = arith.truncf %0 : vector<16x128xf32> to vector<16x128xbf16>
    %cst = arith.constant 0.000000e+00 : f32
    %2 = vector.broadcast %cst : f32 to vector<16x128xf32>
    %c0_1 = arith.constant 0 : index
    %c0_2 = arith.constant 0 : index
    %3 = vector.load %arg9[%c0_1, %c0_2] : memref<16x128xf32, #tpu.memory_space<vmem>>, vector<16x128xf32>
    tpu.vector_store %arg9[%c0_1, %c0_2], %2 {strides = array<i32>} : memref<16x128xf32, #tpu.memory_space<vmem>>, vector<16x128xf32>,
    %c0_i32 = arith.constant 0 : i32
    %c4_i32 = arith.constant 4 : i32
    %4 = arith.addi %c0_i32, %c4_i32 : i32
    %c1_i32 = arith.constant 1 : i32
    scf.for %arg10 = %c0_i32 to %4 step %c1_i32  : i32 {
      %c1_i32_19 = arith.constant 1 : i32
      %33 = arith.muli %arg10, %c1_i32_19 : i32
      %c0_i32_20 = arith.constant 0 : i32
      %34 = arith.addi %c0_i32_20, %33 : i32
      %35 = arith.index_cast %34 : i32 to index
      %c0_21 = arith.constant 0 : index
      %c0_22 = arith.constant 0 : index
      %36 = vector.load %arg2[%35, %c0_21, %c0_22] : memref<4x512x16xbf16, #tpu.memory_space<vmem>>, vector<1x512x16xbf16>
      %37 = vector.shape_cast %36 : vector<1x512x16xbf16> to vector<512x16xbf16>
      %38 = arith.index_cast %34 : i32 to index
      %c0_23 = arith.constant 0 : index
      %c0_24 = arith.constant 0 : index
      %39 = vector.load %arg3[%38, %c0_23, %c0_24] : memref<4x512x1xf32, #tpu.memory_space<vmem>>, vector<1x512x1xf32>
      %40 = vector.shape_cast %39 : vector<1x512x1xf32> to vector<512x1xf32>
      %41 = arith.index_cast %34 : i32 to index
      %c0_25 = arith.constant 0 : index
      %c0_26 = arith.constant 0 : index
      %42 = vector.load %arg4[%41, %c0_25, %c0_26] : memref<4x16x512xbf16, #tpu.memory_space<vmem>>, vector<1x16x512xbf16>
      %43 = vector.shape_cast %42 : vector<1x16x512xbf16> to vector<16x512xbf16>
      %cst_27 = arith.constant dense<0.000000e+00> : vector<512x128xf32>
      %44 = tpu.matmul %37, %1, %cst_27 {dimension_numbers = #tpu.dot_dimension_numbers<[1], [0], [0], [1], [0, 0, 1, 1], [], []>} : vector<512x16xbf16>, vector<16x128xbf16>, vector<512x128xf32> -> vector<512x128xf32>
      %45 = vector.broadcast %40 : vector<512x1xf32> to vector<512x128xf32>
      %46 = arith.addf %44, %45 : vector<512x128xf32>
      %cst_28 = arith.constant 0.000000e+00 : f32
      %47 = vector.broadcast %cst_28 : f32 to vector<512x128xf32>
      %48 = arith.maximumf %46, %47 : vector<512x128xf32>
      %49 = arith.truncf %48 : vector<512x128xf32> to vector<512x128xbf16>
      %c0_29 = arith.constant 0 : index
      %c0_30 = arith.constant 0 : index
      %50 = vector.load %arg9[%c0_29, %c0_30] : memref<16x128xf32, #tpu.memory_space<vmem>>, vector<16x128xf32>
      %cst_31 = arith.constant dense<0.000000e+00> : vector<16x128xf32>
      %51 = tpu.matmul %43, %49, %cst_31 {dimension_numbers = #tpu.dot_dimension_numbers<[1], [0], [0], [1], [0, 0, 1, 1], [], []>} : vector<16x512xbf16>, vector<512x128xbf16>, vector<16x128xf32> -> vector<16x128xf32>
      %52 = arith.addf %50, %51 : vector<16x128xf32>
      %c0_32 = arith.constant 0 : index
      %c0_33 = arith.constant 0 : index
      %53 = vector.load %arg9[%c0_32, %c0_33] : memref<16x128xf32, #tpu.memory_space<vmem>>, vector<16x128xf32>
      tpu.vector_store %arg9[%c0_32, %c0_33], %52 {strides = array<i32>} : memref<16x128xf32, #tpu.memory_space<vmem>>, vector<16x128xf32>,
    }
    %c4_i32_3 = arith.constant 4 : i32
    %c0_4 = arith.constant 0 : index
    %c0_5 = arith.constant 0 : index
    %5 = vector.load %arg9[%c0_4, %c0_5] : memref<16x128xf32, #tpu.memory_space<vmem>>, vector<16x128xf32>
    %c0_6 = arith.constant 0 : index
    %c0_7 = arith.constant 0 : index
    %6 = vector.load %arg5[%c0_6, %c0_7] : memref<16x1xf32, #tpu.memory_space<vmem>>, vector<16x1xf32>
    %7 = vector.broadcast %6 : vector<16x1xf32> to vector<16x128xf32>
    %8 = arith.addf %5, %7 : vector<16x128xf32>
    %9 = arith.addf %8, %0 : vector<16x128xf32>
    %cst_8 = arith.constant dense<0.000000e+00> : vector<128xf32>
    %10 = vector.multi_reduction <add>, %9, %cst_8 [0] : vector<16x128xf32> to vector<128xf32>
    %11 = vector.shape_cast %10 : vector<128xf32> to vector<1x128xf32>
    %cst_9 = arith.constant 1.600000e+01 : f32
    %12 = vector.broadcast %cst_9 : f32 to vector<1x128xf32>
    %13 = arith.divf %11, %12 : vector<1x128xf32>
    %14 = vector.broadcast %13 : vector<1x128xf32> to vector<16x128xf32>
    %15 = arith.subf %9, %14 : vector<16x128xf32>
    %16 = arith.mulf %15, %15 : vector<16x128xf32>
    %cst_10 = arith.constant dense<0.000000e+00> : vector<128xf32>
    %17 = vector.multi_reduction <add>, %16, %cst_10 [0] : vector<16x128xf32> to vector<128xf32>
    %18 = vector.shape_cast %17 : vector<128xf32> to vector<1x128xf32>
    %cst_11 = arith.constant 1.600000e+01 : f32
    %19 = vector.broadcast %cst_11 : f32 to vector<1x128xf32>
    %20 = arith.divf %18, %19 : vector<1x128xf32>
    %cst_12 = arith.constant 9.99999974E-6 : f32
    %21 = vector.broadcast %cst_12 : f32 to vector<1x128xf32>
    %22 = arith.addf %20, %21 : vector<1x128xf32>
    %23 = math.rsqrt %22 : vector<1x128xf32>
    %24 = vector.broadcast %23 : vector<1x128xf32> to vector<16x128xf32>
    %25 = arith.mulf %15, %24 : vector<16x128xf32>
    %c0_13 = arith.constant 0 : index
    %c0_14 = arith.constant 0 : index
    %26 = vector.load %arg6[%c0_13, %c0_14] : memref<16x1xf32, #tpu.memory_space<vmem>>, vector<16x1xf32>
    %27 = vector.broadcast %26 : vector<16x1xf32> to vector<16x128xf32>
    %28 = arith.mulf %25, %27 : vector<16x128xf32>
    %c0_15 = arith.constant 0 : index
    %c0_16 = arith.constant 0 : index
    %29 = vector.load %arg7[%c0_15, %c0_16] : memref<16x1xf32, #tpu.memory_space<vmem>>, vector<16x1xf32>
    %30 = vector.broadcast %29 : vector<16x1xf32> to vector<16x128xf32>
    %31 = arith.addf %28, %30 : vector<16x128xf32>
    %c0_17 = arith.constant 0 : index
    %c0_18 = arith.constant 0 : index
    %32 = vector.load %arg8[%c0_17, %c0_18] : memref<16x128xf32, #tpu.memory_space<vmem>>, vector<16x128xf32>
    tpu.vector_store %arg8[%c0_17, %c0_18], %31 {strides = array<i32>} : memref<16x128xf32, #tpu.memory_space<vmem>>, vector<16x128xf32>,
    return
  }
  func.func @transform_0(%arg0: i32) -> (i32, i32) {
    %c0_i32 = arith.constant 0 : i32
    %c0_i32_0 = arith.constant 0 : i32
    return %c0_i32, %arg0 : i32, i32
  }
  func.func @transform_1(%arg0: i32) -> (i32, i32, i32) {
    %c0_i32 = arith.constant 0 : i32
    %c0_i32_0 = arith.constant 0 : i32
    %c0_i32_1 = arith.constant 0 : i32
    %c0_i32_2 = arith.constant 0 : i32
    return %c0_i32, %c0_i32_0, %c0_i32_1 : i32, i32, i32
  }
  func.func @transform_2(%arg0: i32) -> (i32, i32, i32) {
    %c0_i32 = arith.constant 0 : i32
    %c0_i32_0 = arith.constant 0 : i32
    %c0_i32_1 = arith.constant 0 : i32
    %c0_i32_2 = arith.constant 0 : i32
    return %c0_i32, %c0_i32_0, %c0_i32_1 : i32, i32, i32
  }
  func.func @transform_3(%arg0: i32) -> (i32, i32, i32) {
    %c0_i32 = arith.constant 0 : i32
    %c0_i32_0 = arith.constant 0 : i32
    %c0_i32_1 = arith.constant 0 : i32
    %c0_i32_2 = arith.constant 0 : i32
    return %c0_i32, %c0_i32_0, %c0_i32_1 : i32, i32, i32
  }
  func.func @transform_4(%arg0: i32) -> (i32, i32) {
    %c0_i32 = arith.constant 0 : i32
    %c0_i32_0 = arith.constant 0 : i32
    %c0_i32_1 = arith.constant 0 : i32
    return %c0_i32, %c0_i32_0 : i32, i32
  }
  func.func @transform_5(%arg0: i32) -> (i32, i32) {
    %c0_i32 = arith.constant 0 : i32
    %c0_i32_0 = arith.constant 0 : i32
    %c0_i32_1 = arith.constant 0 : i32
    return %c0_i32, %c0_i32_0 : i32, i32
  }
  func.func @transform_6(%arg0: i32) -> (i32, i32) {
    %c0_i32 = arith.constant 0 : i32
    %c0_i32_0 = arith.constant 0 : i32
    %c0_i32_1 = arith.constant 0 : i32
    return %c0_i32, %c0_i32_0 : i32, i32
  }
  func.func @transform_7(%arg0: i32) -> (i32, i32) {
    %c0_i32 = arith.constant 0 : i32
    %c0_i32_0 = arith.constant 0 : i32
    return %c0_i32, %arg0 : i32, i32
  }
}

</mosaic_0001>

<llo_original>
// kernel: tpu_custom_call.1
$region0: #{tpu_custom_call.1}
  #allocation0 [shape = 'u32[]', space=smem, size = 0x4, offset = 0x4, fixed_abs, tag = 'smem constant byte address 0x4 - core index']
  #allocation1 [shape = 'u32[144,128]{1,0:T(1,128)}', space=vmem, size = 0x12000, scoped, tag = 'internal scratch']
  #allocation2 [shape = 'f32[16,128]{1,0:T(8,128)}', space=vmem, size = 0x2000, scoped, tag = 'scratch operand']
  %s0 = inlined_call_operand.vmem [shape: f32[16,128], index: 0, kind: input, shape index: {}]
  %s1 = inlined_call_operand.vmem [shape: bf16[4,512,16], index: 1, kind: input, shape index: {}]
  %s2 = inlined_call_operand.vmem [shape: f32[4,512,1], index: 2, kind: input, shape index: {}]
  %s3 = inlined_call_operand.vmem [shape: bf16[4,16,512], index: 3, kind: input, shape index: {}]
  %s4 = inlined_call_operand.vmem [shape: f32[16,1], index: 4, kind: input, shape index: {}]
  %s5 = inlined_call_operand.vmem [shape: f32[16,1], index: 5, kind: input, shape index: {}]
  %s6 = inlined_call_operand.vmem [shape: f32[16,1], index: 6, kind: input, shape index: {}]
  %s7 = inlined_call_operand.hbm [shape: f32[16,128], index: 7, kind: output, shape index: {}]
  %s8 = sld [smem:[#allocation0]]
  $region45: #{tpu_custom_call.1} parent=0
    _
  %s10 = ssub.s32 1, %s8
  %s11 = scalar_select 0, %s10, %s8
  $region1: #{tpu_custom_call.1} parent=0
    #allocation3 [shape = 'u8[8192]{0}', space=vmem, size = 0x2000, scoped, tag = 'output window, operand 0, single buffered']
    #allocation4 [shape = 's32[1]{0}', space=sflag, size = 0x4, scoped, tag = 'scoped memory for tpu_custom_call.1']
    %12 = vsyncpa [#allocation4], 0
    // Predicated region
    $region2: #{tpu_custom_call.1} parent=1 // pred_check
      _
    $region3: #{tpu_custom_call.1} parent=1 // pred_check_branch
      %14 = sbr.rel (0) target = $region5
    $region4: #{tpu_custom_call.1} parent=1 // pred_region
      _
    $region5: #{tpu_custom_call.1} parent=1 // pred_fallthru
      _
    // Predicated region
    $region6: #{tpu_custom_call.1} parent=1 // pred_check
      _
    $region7: #{tpu_custom_call.1} parent=1 // pred_check_branch
      %16 = sbr.rel (0) target = $region9
    $region8: #{tpu_custom_call.1} parent=1 // pred_region
      _
    $region9: #{tpu_custom_call.1} parent=1 // pred_fallthru
      _
    // Predicated region
    $region10: #{tpu_custom_call.1} parent=1 // pred_check
      _
    $region11: #{tpu_custom_call.1} parent=1 // pred_check_branch
      %18 = sbr.rel (0) target = $region13
    $region12: #{tpu_custom_call.1} parent=1 // pred_region
      _
    $region13: #{tpu_custom_call.1} parent=1 // pred_fallthru
      _
    // Predicated region
    $region14: #{tpu_custom_call.1} parent=1 // pred_check
      _
    $region15: #{tpu_custom_call.1} parent=1 // pred_check_branch
      %20 = sbr.rel (0) target = $region17
    $region16: #{tpu_custom_call.1} parent=1 // pred_region
      _
    $region17: #{tpu_custom_call.1} parent=1 // pred_fallthru
      _
    // Predicated region
    $region18: #{tpu_custom_call.1} parent=1 // pred_check
      _
    $region19: #{tpu_custom_call.1} parent=1 // pred_check_branch
      %22 = sbr.rel (0) target = $region21
    $region20: #{tpu_custom_call.1} parent=1 // pred_region
      _
    $region21: #{tpu_custom_call.1} parent=1 // pred_fallthru
      _
    // Predicated region
    $region22: #{tpu_custom_call.1} parent=1 // pred_check
      _
    $region23: #{tpu_custom_call.1} parent=1 // pred_check_branch
      %24 = sbr.rel (0) target = $region25
    $region24: #{tpu_custom_call.1} parent=1 // pred_region
      _
    $region25: #{tpu_custom_call.1} parent=1 // pred_fallthru
      _
    // Predicated region
    $region26: #{tpu_custom_call.1} parent=1 // pred_check
      _
    $region27: #{tpu_custom_call.1} parent=1 // pred_check_branch
      %26 = sbr.rel (0) target = $region29
    $region28: #{tpu_custom_call.1} parent=1 // pred_region
      _
    $region29: #{tpu_custom_call.1} parent=1 // pred_fallthru
      _
    %v28 = vld [vmem:[%s0] sm:$0xff]
    %v29 = vld [vmem:[%s0 + $0x8] sm:$0xff]
    %v30 = vpack.c.bf16 %v29, %v28
    %31 = vst [vmem:[#allocation2] sm:$0xff] 0.0
    %32 = vst [vmem:[#allocation2 + $0x8] sm:$0xff] 0.0
    loop: start=0, step=1, limit=4
    $region30: #{tpu_custom_call.1} parent=1 // loop_pre_header
      _
    $region31: #{tpu_custom_call.1} parent=1 // loop_header
      %s34 = sphi 0, %s38
      %p35 = scmp.ge.s32.totalorder %s34, 4
    $region32: #{tpu_custom_call.1} parent=1 // loop_header_branch
      %37 = sbr.rel (%p35) target = $region36
    $region33: #{tpu_custom_call.1} parent=1 // loop_body
      %s39 = smul.u32 %s34, 64
      %s40 = smul.addr %s39, 4
      %s41 = scalar_lea.vmem %s1, %s40
      %v42 = vld [vmem:[%s41] sm:$0xf]
      %v43 = vld [vmem:[%s41 + $0x4] sm:$0xf]
      %v44 = vld [vmem:[%s41 + $0x8] sm:$0xf]
      %v45 = vld [vmem:[%s41 + $0xc] sm:$0xf]
      %v46 = vld [vmem:[%s41 + $0x10] sm:$0xf]
      %v47 = vld [vmem:[%s41 + $0x14] sm:$0xf]
      %v48 = vld [vmem:[%s41 + $0x18] sm:$0xf]
      %v49 = vld [vmem:[%s41 + $0x1c] sm:$0xf]
      %v50 = vld [vmem:[%s41 + $0x20] sm:$0xf]
      %v51 = vld [vmem:[%s41 + $0x24] sm:$0xf]
      %v52 = vld [vmem:[%s41 + $0x28] sm:$0xf]
      %v53 = vld [vmem:[%s41 + $0x2c] sm:$0xf]
      %v54 = vld [vmem:[%s41 + $0x30] sm:$0xf]
      %v55 = vld [vmem:[%s41 + $0x34] sm:$0xf]
      %v56 = vld [vmem:[%s41 + $0x38] sm:$0xf]
      %v57 = vld [vmem:[%s41 + $0x3c] sm:$0xf]
      %v58 = vld [vmem:[%s41 + $0x40] sm:$0xf]
      %v59 = vld [vmem:[%s41 + $0x44] sm:$0xf]
      %v60 = vld [vmem:[%s41 + $0x48] sm:$0xf]
      %v61 = vld [vmem:[%s41 + $0x4c] sm:$0xf]
      %v62 = vld [vmem:[%s41 + $0x50] sm:$0xf]
      %v63 = vld [vmem:[%s41 + $0x54] sm:$0xf]
      %v64 = vld [vmem:[%s41 + $0x58] sm:$0xf]
      %v65 = vld [vmem:[%s41 + $0x5c] sm:$0xf]
      %v66 = vld [vmem:[%s41 + $0x60] sm:$0xf]
      %v67 = vld [vmem:[%s41 + $0x64] sm:$0xf]
      %v68 = vld [vmem:[%s41 + $0x68] sm:$0xf]
      %v69 = vld [vmem:[%s41 + $0x6c] sm:$0xf]
      %v70 = vld [vmem:[%s41 + $0x70] sm:$0xf]
      %v71 = vld [vmem:[%s41 + $0x74] sm:$0xf]
      %v72 = vld [vmem:[%s41 + $0x78] sm:$0xf]
      %v73 = vld [vmem:[%s41 + $0x7c] sm:$0xf]
      %v74 = vld [vmem:[%s41 + $0x80] sm:$0xf]
      %v75 = vld [vmem:[%s41 + $0x84] sm:$0xf]
      %v76 = vld [vmem:[%s41 + $0x88] sm:$0xf]
      %v77 = vld [vmem:[%s41 + $0x8c] sm:$0xf]
      %v78 = vld [vmem:[%s41 + $0x90] sm:$0xf]
      %v79 = vld [vmem:[%s41 + $0x94] sm:$0xf]
      %v80 = vld [vmem:[%s41 + $0x98] sm:$0xf]
      %v81 = vld [vmem:[%s41 + $0x9c] sm:$0xf]
      %v82 = vld [vmem:[%s41 + $0xa0] sm:$0xf]
      %v83 = vld [vmem:[%s41 + $0xa4] sm:$0xf]
      %v84 = vld [vmem:[%s41 + $0xa8] sm:$0xf]
      %v85 = vld [vmem:[%s41 + $0xac] sm:$0xf]
      %v86 = vld [vmem:[%s41 + $0xb0] sm:$0xf]
      %v87 = vld [vmem:[%s41 + $0xb4] sm:$0xf]
      %v88 = vld [vmem:[%s41 + $0xb8] sm:$0xf]
      %v89 = vld [vmem:[%s41 + $0xbc] sm:$0xf]
      %v90 = vld [vmem:[%s41 + $0xc0] sm:$0xf]
      %v91 = vld [vmem:[%s41 + $0xc4] sm:$0xf]
      %v92 = vld [vmem:[%s41 + $0xc8] sm:$0xf]
      %v93 = vld [vmem:[%s41 + $0xcc] sm:$0xf]
      %v94 = vld [vmem:[%s41 + $0xd0] sm:$0xf]
      %v95 = vld [vmem:[%s41 + $0xd4] sm:$0xf]
      %v96 = vld [vmem:[%s41 + $0xd8] sm:$0xf]
      %v97 = vld [vmem:[%s41 + $0xdc] sm:$0xf]
      %v98 = vld [vmem:[%s41 + $0xe0] sm:$0xf]
      %v99 = vld [vmem:[%s41 + $0xe4] sm:$0xf]
      %v100 = vld [vmem:[%s41 + $0xe8] sm:$0xf]
      %v101 = vld [vmem:[%s41 + $0xec] sm:$0xf]
      %v102 = vld [vmem:[%s41 + $0xf0] sm:$0xf]
      %v103 = vld [vmem:[%s41 + $0xf4] sm:$0xf]
      %v104 = vld [vmem:[%s41 + $0xf8] sm:$0xf]
      %v105 = vld [vmem:[%s41 + $0xfc] sm:$0xf]
      %s106 = smul.u32 %s34, 512
      %s107 = scalar_lea.vmem %s2, %s106
      %v108 = vld [vmem:[%s107] sm:$0xff]
      %v109 = vld [vmem:[%s107 + $0x8] sm:$0xff]
      %v110 = vld [vmem:[%s107 + $0x10] sm:$0xff]
      %v111 = vld [vmem:[%s107 + $0x18] sm:$0xff]
      %v112 = vld [vmem:[%s107 + $0x20] sm:$0xff]
      %v113 = vld [vmem:[%s107 + $0x28] sm:$0xff]
      %v114 = vld [vmem:[%s107 + $0x30] sm:$0xff]
      %v115 = vld [vmem:[%s107 + $0x38] sm:$0xff]
      %v116 = vld [vmem:[%s107 + $0x40] sm:$0xff]
      %v117 = vld [vmem:[%s107 + $0x48] sm:$0xff]
      %v118 = vld [vmem:[%s107 + $0x50] sm:$0xff]
      %v119 = vld [vmem:[%s107 + $0x58] sm:$0xff]
      %v120 = vld [vmem:[%s107 + $0x60] sm:$0xff]
      %v121 = vld [vmem:[%s107 + $0x68] sm:$0xff]
      %v122 = vld [vmem:[%s107 + $0x70] sm:$0xff]
      %v123 = vld [vmem:[%s107 + $0x78] sm:$0xff]
      %v124 = vld [vmem:[%s107 + $0x80] sm:$0xff]
      %v125 = vld [vmem:[%s107 + $0x88] sm:$0xff]
      %v126 = vld [vmem:[%s107 + $0x90] sm:$0xff]
      %v127 = vld [vmem:[%s107 + $0x98] sm:$0xff]
      %v128 = vld [vmem:[%s107 + $0xa0] sm:$0xff]
      %v129 = vld [vmem:[%s107 + $0xa8] sm:$0xff]
      %v130 = vld [vmem:[%s107 + $0xb0] sm:$0xff]
      %v131 = vld [vmem:[%s107 + $0xb8] sm:$0xff]
      %v132 = vld [vmem:[%s107 + $0xc0] sm:$0xff]
      %v133 = vld [vmem:[%s107 + $0xc8] sm:$0xff]
      %v134 = vld [vmem:[%s107 + $0xd0] sm:$0xff]
      %v135 = vld [vmem:[%s107 + $0xd8] sm:$0xff]
      %v136 = vld [vmem:[%s107 + $0xe0] sm:$0xff]
      %v137 = vld [vmem:[%s107 + $0xe8] sm:$0xff]
      %v138 = vld [vmem:[%s107 + $0xf0] sm:$0xff]
      %v139 = vld [vmem:[%s107 + $0xf8] sm:$0xff]
      %v140 = vld [vmem:[%s107 + $0x100] sm:$0xff]
      %v141 = vld [vmem:[%s107 + $0x108] sm:$0xff]
      %v142 = vld [vmem:[%s107 + $0x110] sm:$0xff]
      %v143 = vld [vmem:[%s107 + $0x118] sm:$0xff]
      %v144 = vld [vmem:[%s107 + $0x120] sm:$0xff]
      %v145 = vld [vmem:[%s107 + $0x128] sm:$0xff]
      %v146 = vld [vmem:[%s107 + $0x130] sm:$0xff]
      %v147 = vld [vmem:[%s107 + $0x138] sm:$0xff]
      %v148 = vld [vmem:[%s107 + $0x140] sm:$0xff]
      %v149 = vld [vmem:[%s107 + $0x148] sm:$0xff]
      %v150 = vld [vmem:[%s107 + $0x150] sm:$0xff]
      %v151 = vld [vmem:[%s107 + $0x158] sm:$0xff]
      %v152 = vld [vmem:[%s107 + $0x160] sm:$0xff]
      %v153 = vld [vmem:[%s107 + $0x168] sm:$0xff]
      %v154 = vld [vmem:[%s107 + $0x170] sm:$0xff]
      %v155 = vld [vmem:[%s107 + $0x178] sm:$0xff]
      %v156 = vld [vmem:[%s107 + $0x180] sm:$0xff]
      %v157 = vld [vmem:[%s107 + $0x188] sm:$0xff]
      %v158 = vld [vmem:[%s107 + $0x190] sm:$0xff]
      %v159 = vld [vmem:[%s107 + $0x198] sm:$0xff]
      %v160 = vld [vmem:[%s107 + $0x1a0] sm:$0xff]
      %v161 = vld [vmem:[%s107 + $0x1a8] sm:$0xff]
      %v162 = vld [vmem:[%s107 + $0x1b0] sm:$0xff]
      %v163 = vld [vmem:[%s107 + $0x1b8] sm:$0xff]
      %v164 = vld [vmem:[%s107 + $0x1c0] sm:$0xff]
      %v165 = vld [vmem:[%s107 + $0x1c8] sm:$0xff]
      %v166 = vld [vmem:[%s107 + $0x1d0] sm:$0xff]
      %v167 = vld [vmem:[%s107 + $0x1d8] sm:$0xff]
      %v168 = vld [vmem:[%s107 + $0x1e0] sm:$0xff]
      %v169 = vld [vmem:[%s107 + $0x1e8] sm:$0xff]
      %v170 = vld [vmem:[%s107 + $0x1f0] sm:$0xff]
      %v171 = vld [vmem:[%s107 + $0x1f8] sm:$0xff]
      %s172 = smul.u32 %s34, 8
      %s173 = smul.addr %s172, 4
      %s174 = scalar_lea.vmem %s3, %s173
      %v175 = vld [vmem:[%s174] sm:$0xff]
      %v176 = vld [vmem:[%s174 + $0x8] sm:$0xff]
      %v177 = vld [vmem:[%s174 + $0x10] sm:$0xff]
      %v178 = vld [vmem:[%s174 + $0x18] sm:$0xff]
      %180 = vset.pattern.permute.xlu0 0
      %181 = vperm.xlu0 %180, %v108
      %v182 = vpop.permute.xlu0 %181
      %185 = vset.pattern.permute.xlu0 0
      %186 = vperm.xlu0 %185, %v109
      %v187 = vpop.permute.xlu0 %186
      %190 = vset.pattern.permute.xlu0 0
      %191 = vperm.xlu0 %190, %v110
      %v192 = vpop.permute.xlu0 %191
      %195 = vset.pattern.permute.xlu0 0
      %196 = vperm.xlu0 %195, %v111
      %v197 = vpop.permute.xlu0 %196
      %200 = vset.pattern.permute.xlu0 0
      %201 = vperm.xlu0 %200, %v112
      %v202 = vpop.permute.xlu0 %201
      %205 = vset.pattern.permute.xlu0 0
      %206 = vperm.xlu0 %205, %v113
      %v207 = vpop.permute.xlu0 %206
      %210 = vset.pattern.permute.xlu0 0
      %211 = vperm.xlu0 %210, %v114
      %v212 = vpop.permute.xlu0 %211
      %215 = vset.pattern.permute.xlu0 0
      %216 = vperm.xlu0 %215, %v115
      %v217 = vpop.permute.xlu0 %216
      %220 = vset.pattern.permute.xlu0 0
      %221 = vperm.xlu0 %220, %v116
      %v222 = vpop.permute.xlu0 %221
      %225 = vset.pattern.permute.xlu0 0
      %226 = vperm.xlu0 %225, %v117
      %v227 = vpop.permute.xlu0 %226
      %230 = vset.pattern.permute.xlu0 0
      %231 = vperm.xlu0 %230, %v118
      %v232 = vpop.permute.xlu0 %231
      %235 = vset.pattern.permute.xlu0 0
      %236 = vperm.xlu0 %235, %v119
      %v237 = vpop.permute.xlu0 %236
      %240 = vset.pattern.permute.xlu0 0
      %241 = vperm.xlu0 %240, %v120
      %v242 = vpop.permute.xlu0 %241
      %245 = vset.pattern.permute.xlu0 0
      %246 = vperm.xlu0 %245, %v121
      %v247 = vpop.permute.xlu0 %246
      %250 = vset.pattern.permute.xlu0 0
      %251 = vperm.xlu0 %250, %v122
      %v252 = vpop.permute.xlu0 %251
      %255 = vset.pattern.permute.xlu0 0
      %256 = vperm.xlu0 %255, %v123
      %v257 = vpop.permute.xlu0 %256
      %260 = vset.pattern.permute.xlu0 0
      %261 = vperm.xlu0 %260, %v124
      %v262 = vpop.permute.xlu0 %261
      %265 = vset.pattern.permute.xlu0 0
      %266 = vperm.xlu0 %265, %v125
      %v267 = vpop.permute.xlu0 %266
      %270 = vset.pattern.permute.xlu0 0
      %271 = vperm.xlu0 %270, %v126
      %v272 = vpop.permute.xlu0 %271
      %275 = vset.pattern.permute.xlu0 0
      %276 = vperm.xlu0 %275, %v127
      %v277 = vpop.permute.xlu0 %276
      %280 = vset.pattern.permute.xlu0 0
      %281 = vperm.xlu0 %280, %v128
      %v282 = vpop.permute.xlu0 %281
      %285 = vset.pattern.permute.xlu0 0
      %286 = vperm.xlu0 %285, %v129
      %v287 = vpop.permute.xlu0 %286
      %290 = vset.pattern.permute.xlu0 0
      %291 = vperm.xlu0 %290, %v130
      %v292 = vpop.permute.xlu0 %291
      %295 = vset.pattern.permute.xlu0 0
      %296 = vperm.xlu0 %295, %v131
      %v297 = vpop.permute.xlu0 %296
      %300 = vset.pattern.permute.xlu0 0
      %301 = vperm.xlu0 %300, %v132
      %v302 = vpop.permute.xlu0 %301
      %305 = vset.pattern.permute.xlu0 0
      %306 = vperm.xlu0 %305, %v133
      %v307 = vpop.permute.xlu0 %306
      %310 = vset.pattern.permute.xlu0 0
      %311 = vperm.xlu0 %310, %v134
      %v312 = vpop.permute.xlu0 %311
      %315 = vset.pattern.permute.xlu0 0
      %316 = vperm.xlu0 %315, %v135
      %v317 = vpop.permute.xlu0 %316
      %320 = vset.pattern.permute.xlu0 0
      %321 = vperm.xlu0 %320, %v136
      %v322 = vpop.permute.xlu0 %321
      %325 = vset.pattern.permute.xlu0 0
      %326 = vperm.xlu0 %325, %v137
      %v327 = vpop.permute.xlu0 %326
      %330 = vset.pattern.permute.xlu0 0
      %331 = vperm.xlu0 %330, %v138
      %v332 = vpop.permute.xlu0 %331
      %335 = vset.pattern.permute.xlu0 0
      %336 = vperm.xlu0 %335, %v139
      %v337 = vpop.permute.xlu0 %336
      %340 = vset.pattern.permute.xlu0 0
      %341 = vperm.xlu0 %340, %v140
      %v342 = vpop.permute.xlu0 %341
      %345 = vset.pattern.permute.xlu0 0
      %346 = vperm.xlu0 %345, %v141
      %v347 = vpop.permute.xlu0 %346
      %350 = vset.pattern.permute.xlu0 0
      %351 = vperm.xlu0 %350, %v142
      %v352 = vpop.permute.xlu0 %351
      %355 = vset.pattern.permute.xlu0 0
      %356 = vperm.xlu0 %355, %v143
      %v357 = vpop.permute.xlu0 %356
      %360 = vset.pattern.permute.xlu0 0
      %361 = vperm.xlu0 %360, %v144
      %v362 = vpop.permute.xlu0 %361
      %365 = vset.pattern.permute.xlu0 0
      %366 = vperm.xlu0 %365, %v145
      %v367 = vpop.permute.xlu0 %366
      %370 = vset.pattern.permute.xlu0 0
      %371 = vperm.xlu0 %370, %v146
      %v372 = vpop.permute.xlu0 %371
      %375 = vset.pattern.permute.xlu0 0
      %376 = vperm.xlu0 %375, %v147
      %v377 = vpop.permute.xlu0 %376
      %380 = vset.pattern.permute.xlu0 0
      %381 = vperm.xlu0 %380, %v148
      %v382 = vpop.permute.xlu0 %381
      %385 = vset.pattern.permute.xlu0 0
      %386 = vperm.xlu0 %385, %v149
      %v387 = vpop.permute.xlu0 %386
      %390 = vset.pattern.permute.xlu0 0
      %391 = vperm.xlu0 %390, %v150
      %v392 = vpop.permute.xlu0 %391
      %395 = vset.pattern.permute.xlu0 0
      %396 = vperm.xlu0 %395, %v151
      %v397 = vpop.permute.xlu0 %396
      %400 = vset.pattern.permute.xlu0 0
      %401 = vperm.xlu0 %400, %v152
      %v402 = vpop.permute.xlu0 %401
      %405 = vset.pattern.permute.xlu0 0
      %406 = vperm.xlu0 %405, %v153
      %v407 = vpop.permute.xlu0 %406
      %410 = vset.pattern.permute.xlu0 0
      %411 = vperm.xlu0 %410, %v154
      %v412 = vpop.permute.xlu0 %411
      %415 = vset.pattern.permute.xlu0 0
      %416 = vperm.xlu0 %415, %v155
      %v417 = vpop.permute.xlu0 %416
      %420 = vset.pattern.permute.xlu0 0
      %421 = vperm.xlu0 %420, %v156
      %v422 = vpop.permute.xlu0 %421
      %425 = vset.pattern.permute.xlu0 0
      %426 = vperm.xlu0 %425, %v157
      %v427 = vpop.permute.xlu0 %426
      %430 = vset.pattern.permute.xlu0 0
      %431 = vperm.xlu0 %430, %v158
      %v432 = vpop.permute.xlu0 %431
      %435 = vset.pattern.permute.xlu0 0
      %436 = vperm.xlu0 %435, %v159
      %v437 = vpop.permute.xlu0 %436
      %440 = vset.pattern.permute.xlu0 0
      %441 = vperm.xlu0 %440, %v160
      %v442 = vpop.permute.xlu0 %441
      %445 = vset.pattern.permute.xlu0 0
      %446 = vperm.xlu0 %445, %v161
      %v447 = vpop.permute.xlu0 %446
      %450 = vset.pattern.permute.xlu0 0
      %451 = vperm.xlu0 %450, %v162
      %v452 = vpop.permute.xlu0 %451
      %455 = vset.pattern.permute.xlu0 0
      %456 = vperm.xlu0 %455, %v163
      %v457 = vpop.permute.xlu0 %456
      %460 = vset.pattern.permute.xlu0 0
      %461 = vperm.xlu0 %460, %v164
      %v462 = vpop.permute.xlu0 %461
      %465 = vset.pattern.permute.xlu0 0
      %466 = vperm.xlu0 %465, %v165
      %v467 = vpop.permute.xlu0 %466
      %470 = vset.pattern.permute.xlu0 0
      %471 = vperm.xlu0 %470, %v166
      %v472 = vpop.permute.xlu0 %471
      %475 = vset.pattern.permute.xlu0 0
      %476 = vperm.xlu0 %475, %v167
      %v477 = vpop.permute.xlu0 %476
      %480 = vset.pattern.permute.xlu0 0
      %481 = vperm.xlu0 %480, %v168
      %v482 = vpop.permute.xlu0 %481
      %485 = vset.pattern.permute.xlu0 0
      %486 = vperm.xlu0 %485, %v169
      %v487 = vpop.permute.xlu0 %486
      %490 = vset.pattern.permute.xlu0 0
      %491 = vperm.xlu0 %490, %v170
      %v492 = vpop.permute.xlu0 %491
      %495 = vset.pattern.permute.xlu0 0
      %496 = vperm.xlu0 %495, %v171
      %v497 = vpop.permute.xlu0 %496
      %v563 = vunpack.c.l.b16 %v42
      %v564 = vunpack.c.l.b16 %v43
      %v565 = vunpack.c.l.b16 %v44
      %v566 = vunpack.c.l.b16 %v45
      %v567 = vunpack.c.l.b16 %v46
      %v568 = vunpack.c.l.b16 %v47
      %v569 = vunpack.c.l.b16 %v48
      %v570 = vunpack.c.l.b16 %v49
      %v571 = vunpack.c.l.b16 %v50
      %v572 = vunpack.c.l.b16 %v51
      %v573 = vunpack.c.l.b16 %v52
      %v574 = vunpack.c.l.b16 %v53
      %v575 = vunpack.c.l.b16 %v54
      %v576 = vunpack.c.l.b16 %v55
      %v577 = vunpack.c.l.b16 %v56
      %v578 = vunpack.c.l.b16 %v57
      %v579 = vunpack.c.l.b16 %v58
      %v580 = vunpack.c.l.b16 %v59
      %v581 = vunpack.c.l.b16 %v60
      %v582 = vunpack.c.l.b16 %v61
      %v583 = vunpack.c.l.b16 %v62
      %v584 = vunpack.c.l.b16 %v63
      %v585 = vunpack.c.l.b16 %v64
      %v586 = vunpack.c.l.b16 %v65
      %v587 = vunpack.c.l.b16 %v66
      %v588 = vunpack.c.l.b16 %v67
      %v589 = vunpack.c.l.b16 %v68
      %v590 = vunpack.c.l.b16 %v69
      %v591 = vunpack.c.l.b16 %v70
      %v592 = vunpack.c.l.b16 %v71
      %v593 = vunpack.c.l.b16 %v72
      %v594 = vunpack.c.l.b16 %v73
      %v595 = vunpack.c.l.b16 %v74
      %v596 = vunpack.c.l.b16 %v75
      %v597 = vunpack.c.l.b16 %v76
      %v598 = vunpack.c.l.b16 %v77
      %v599 = vunpack.c.l.b16 %v78
      %v600 = vunpack.c.l.b16 %v79
      %v601 = vunpack.c.l.b16 %v80
      %v602 = vunpack.c.l.b16 %v81
      %v603 = vunpack.c.l.b16 %v82
      %v604 = vunpack.c.l.b16 %v83
      %v605 = vunpack.c.l.b16 %v84
      %v606 = vunpack.c.l.b16 %v85
      %v607 = vunpack.c.l.b16 %v86
      %v608 = vunpack.c.l.b16 %v87
      %v609 = vunpack.c.l.b16 %v88
      %v610 = vunpack.c.l.b16 %v89
      %v611 = vunpack.c.l.b16 %v90
      %v612 = vunpack.c.l.b16 %v91
      %v613 = vunpack.c.l.b16 %v92
      %v614 = vunpack.c.l.b16 %v93
      %v615 = vunpack.c.l.b16 %v94
      %v616 = vunpack.c.l.b16 %v95
      %v617 = vunpack.c.l.b16 %v96
      %v618 = vunpack.c.l.b16 %v97
      %v619 = vunpack.c.l.b16 %v98
      %v620 = vunpack.c.l.b16 %v99
      %v621 = vunpack.c.l.b16 %v100
      %v622 = vunpack.c.l.b16 %v101
      %v623 = vunpack.c.l.b16 %v102
      %v624 = vunpack.c.l.b16 %v103
      %v625 = vunpack.c.l.b16 %v104
      %v626 = vunpack.c.l.b16 %v105
      %v627 = vpack.c.b16 %v564, %v563
      %v628 = vpack.c.b16 %v566, %v565
      %v629 = vpack.c.b16 %v568, %v567
      %v630 = vpack.c.b16 %v570, %v569
      %v631 = vpack.c.b16 %v572, %v571
      %v632 = vpack.c.b16 %v574, %v573
      %v633 = vpack.c.b16 %v576, %v575
      %v634 = vpack.c.b16 %v578, %v577
      %v635 = vpack.c.b16 %v580, %v579
      %v636 = vpack.c.b16 %v582, %v581
      %v637 = vpack.c.b16 %v584, %v583
      %v638 = vpack.c.b16 %v586, %v585
      %v639 = vpack.c.b16 %v588, %v587
      %v640 = vpack.c.b16 %v590, %v589
      %v641 = vpack.c.b16 %v592, %v591
      %v642 = vpack.c.b16 %v594, %v593
      %v643 = vpack.c.b16 %v596, %v595
      %v644 = vpack.c.b16 %v598, %v597
      %v645 = vpack.c.b16 %v600, %v599
      %v646 = vpack.c.b16 %v602, %v601
      %v647 = vpack.c.b16 %v604, %v603
      %v648 = vpack.c.b16 %v606, %v605
      %v649 = vpack.c.b16 %v608, %v607
      %v650 = vpack.c.b16 %v610, %v609
      %v651 = vpack.c.b16 %v612, %v611
      %v652 = vpack.c.b16 %v614, %v613
      %v653 = vpack.c.b16 %v616, %v615
      %v654 = vpack.c.b16 %v618, %v617
      %v655 = vpack.c.b16 %v620, %v619
      %v656 = vpack.c.b16 %v622, %v621
      %v657 = vpack.c.b16 %v624, %v623
      %v658 = vpack.c.b16 %v626, %v625
      %vm659 = vcmask 130048
      %v661 = vsel %vm659, %v627, 0
      %v664 = vsel %vm659, %v628, 0
      %v667 = vsel %vm659, %v629, 0
      %v670 = vsel %vm659, %v630, 0
      %v673 = vsel %vm659, %v631, 0
      %v676 = vsel %vm659, %v632, 0
      %v679 = vsel %vm659, %v633, 0
      %v682 = vsel %vm659, %v634, 0
      %v685 = vsel %vm659, %v635, 0
      %v688 = vsel %vm659, %v636, 0
      %v691 = vsel %vm659, %v637, 0
      %v694 = vsel %vm659, %v638, 0
      %v697 = vsel %vm659, %v639, 0
      %v700 = vsel %vm659, %v640, 0
      %v703 = vsel %vm659, %v641, 0
      %v706 = vsel %vm659, %v642, 0
      %v709 = vsel %vm659, %v643, 0
      %v712 = vsel %vm659, %v644, 0
      %v715 = vsel %vm659, %v645, 0
      %v718 = vsel %vm659, %v646, 0
      %v721 = vsel %vm659, %v647, 0
      %v724 = vsel %vm659, %v648, 0
      %v727 = vsel %vm659, %v649, 0
      %v730 = vsel %vm659, %v650, 0
      %v733 = vsel %vm659, %v651, 0
      %v736 = vsel %vm659, %v652, 0
      %v739 = vsel %vm659, %v653, 0
      %v742 = vsel %vm659, %v654, 0
      %v745 = vsel %vm659, %v655, 0
      %v748 = vsel %vm659, %v656, 0
      %v751 = vsel %vm659, %v657, 0
      %v754 = vsel %vm659, %v658, 0
      %756 = vmatprep.subr.bf16.mxu0 0
      %757 = vmatpush1.bf16.msra.mxu0 %v30
      %758 = vmatprep.subr.bf16.mxu0 0
      %759 = vmatpush1.bf16.msra.mxu0 0
      %760 = vmatprep.subr.bf16.mxu0 0
      %761 = vmatpush1.bf16.msra.mxu0 0
      %762 = vmatprep.subr.bf16.mxu0 0
      %763 = vmatpush1.bf16.msra.mxu0 0
      %764 = vmatprep.subr.bf16.mxu0 0
      %765 = vmatpush1.bf16.msra.mxu0 0
      %766 = vmatprep.subr.bf16.mxu0 0
      %767 = vmatpush1.bf16.msra.mxu0 0
      %768 = vmatprep.subr.bf16.mxu0 0
      %769 = vmatpush1.bf16.msra.mxu0 0
      %770 = vmatprep.subr.bf16.mxu0 0
      %771 = vmatpush1.bf16.msra.mxu0 0
      %772 = vmatprep.subr.bf16.mxu0 0
      %773 = vmatpush1.bf16.msra.mxu0 0
      %774 = vmatprep.subr.bf16.mxu0 0
      %775 = vmatpush1.bf16.msra.mxu0 0
      %776 = vmatprep.subr.bf16.mxu0 0
      %777 = vmatpush1.bf16.msra.mxu0 0
      %778 = vmatprep.subr.bf16.mxu0 0
      %779 = vmatpush1.bf16.msra.mxu0 0
      %780 = vmatprep.subr.bf16.mxu0 0
      %781 = vmatpush1.bf16.msra.mxu0 0
      %782 = vmatprep.subr.bf16.mxu0 0
      %783 = vmatpush1.bf16.msra.mxu0 0
      %784 = vmatprep.subr.bf16.mxu0 0
      %785 = vmatpush1.bf16.msra.mxu0 0
      %786 = vmatprep.subr.bf16.mxu0 0
      %787 = vmatpush1.bf16.msra.mxu0 0
      %788 = vmatprep.mubr.bf16.mxu0 0
      %789 = vmatmul.mubr.bf16.gmra.mrb[0].mxu0 %v661
      %v790 = vpop.f32.mrb[0].mxu0
      %v791 = vadd.f32 %v182, %v790
      %v792 = vpop.f32.mrb[0].mxu0
      %v793 = vpop.f32.mrb[0].mxu0
      %v794 = vadd.f32 %v187, %v793
      %v795 = vpop.f32.mrb[0].mxu0
      %796 = vmatprep.mubr.bf16.mxu0 0
      %797 = vmatmul.mubr.bf16.gmra.mrb[0].mxu0 %v664
      %v798 = vpop.f32.mrb[0].mxu0
      %v799 = vadd.f32 %v192, %v798
      %v800 = vpop.f32.mrb[0].mxu0
      %v801 = vpop.f32.mrb[0].mxu0
      %v802 = vadd.f32 %v197, %v801
      %v803 = vpop.f32.mrb[0].mxu0
      %804 = vmatprep.mubr.bf16.mxu0 0
      %805 = vmatmul.mubr.bf16.gmra.mrb[0].mxu0 %v667
      %v806 = vpop.f32.mrb[0].mxu0
      %v807 = vadd.f32 %v202, %v806
      %v808 = vpop.f32.mrb[0].mxu0
      %v809 = vpop.f32.mrb[0].mxu0
      %v810 = vadd.f32 %v207, %v809
      %v811 = vpop.f32.mrb[0].mxu0
      %812 = vmatprep.mubr.bf16.mxu0 0
      %813 = vmatmul.mubr.bf16.gmra.mrb[0].mxu0 %v670
      %v814 = vpop.f32.mrb[0].mxu0
      %v815 = vadd.f32 %v212, %v814
      %v816 = vpop.f32.mrb[0].mxu0
      %v817 = vpop.f32.mrb[0].mxu0
      %v818 = vadd.f32 %v217, %v817
      %v819 = vpop.f32.mrb[0].mxu0
      %820 = vmatprep.mubr.bf16.mxu0 0
      %821 = vmatmul.mubr.bf16.gmra.mrb[0].mxu0 %v673
      %v822 = vpop.f32.mrb[0].mxu0
      %v823 = vadd.f32 %v222, %v822
      %v824 = vpop.f32.mrb[0].mxu0
      %v825 = vpop.f32.mrb[0].mxu0
      %v826 = vadd.f32 %v227, %v825
      %v827 = vpop.f32.mrb[0].mxu0
      %828 = vmatprep.mubr.bf16.mxu0 0
      %829 = vmatmul.mubr.bf16.gmra.mrb[0].mxu0 %v676
      %v830 = vpop.f32.mrb[0].mxu0
      %v831 = vadd.f32 %v232, %v830
      %v832 = vpop.f32.mrb[0].mxu0
      %v833 = vpop.f32.mrb[0].mxu0
      %v834 = vadd.f32 %v237, %v833
      %v835 = vpop.f32.mrb[0].mxu0
      %836 = vmatprep.mubr.bf16.mxu0 0
      %837 = vmatmul.mubr.bf16.gmra.mrb[0].mxu0 %v679
      %v838 = vpop.f32.mrb[0].mxu0
      %v839 = vadd.f32 %v242, %v838
      %v840 = vpop.f32.mrb[0].mxu0
      %v841 = vpop.f32.mrb[0].mxu0
      %v842 = vadd.f32 %v247, %v841
      %v843 = vpop.f32.mrb[0].mxu0
      %844 = vmatprep.mubr.bf16.mxu0 0
      %845 = vmatmul.mubr.bf16.gmra.mrb[0].mxu0 %v682
      %v846 = vpop.f32.mrb[0].mxu0
      %v847 = vadd.f32 %v252, %v846
      %v848 = vpop.f32.mrb[0].mxu0
      %v849 = vpop.f32.mrb[0].mxu0
      %v850 = vadd.f32 %v257, %v849
      %v851 = vpop.f32.mrb[0].mxu0
      %852 = vmatprep.mubr.bf16.mxu0 0
      %853 = vmatmul.mubr.bf16.gmra.mrb[0].mxu0 %v685
      %v854 = vpop.f32.mrb[0].mxu0
      %v855 = vadd.f32 %v262, %v854
      %v856 = vpop.f32.mrb[0].mxu0
      %v857 = vpop.f32.mrb[0].mxu0
      %v858 = vadd.f32 %v267, %v857
      %v859 = vpop.f32.mrb[0].mxu0
      %860 = vmatprep.mubr.bf16.mxu0 0
      %861 = vmatmul.mubr.bf16.gmra.mrb[0].mxu0 %v688
      %v862 = vpop.f32.mrb[0].mxu0
      %v863 = vadd.f32 %v272, %v862
      %v864 = vpop.f32.mrb[0].mxu0
      %v865 = vpop.f32.mrb[0].mxu0
      %v866 = vadd.f32 %v277, %v865
      %v867 = vpop.f32.mrb[0].mxu0
      %868 = vmatprep.mubr.bf16.mxu0 0
      %869 = vmatmul.mubr.bf16.gmra.mrb[0].mxu0 %v691
      %v870 = vpop.f32.mrb[0].mxu0
      %v871 = vadd.f32 %v282, %v870
      %v872 = vpop.f32.mrb[0].mxu0
      %v873 = vpop.f32.mrb[0].mxu0
      %v874 = vadd.f32 %v287, %v873
      %v875 = vpop.f32.mrb[0].mxu0
      %876 = vmatprep.mubr.bf16.mxu0 0
      %877 = vmatmul.mubr.bf16.gmra.mrb[0].mxu0 %v694
      %v878 = vpop.f32.mrb[0].mxu0
      %v879 = vadd.f32 %v292, %v878
      %v880 = vpop.f32.mrb[0].mxu0
      %v881 = vpop.f32.mrb[0].mxu0
      %v882 = vadd.f32 %v297, %v881
      %v883 = vpop.f32.mrb[0].mxu0
      %884 = vmatprep.mubr.bf16.mxu0 0
      %885 = vmatmul.mubr.bf16.gmra.mrb[0].mxu0 %v697
      %v886 = vpop.f32.mrb[0].mxu0
      %v887 = vadd.f32 %v302, %v886
      %v888 = vpop.f32.mrb[0].mxu0
      %v889 = vpop.f32.mrb[0].mxu0
      %v890 = vadd.f32 %v307, %v889
      %v891 = vpop.f32.mrb[0].mxu0
      %892 = vmatprep.mubr.bf16.mxu0 0
      %893 = vmatmul.mubr.bf16.gmra.mrb[0].mxu0 %v700
      %v894 = vpop.f32.mrb[0].mxu0
      %v895 = vadd.f32 %v312, %v894
      %v896 = vpop.f32.mrb[0].mxu0
      %v897 = vpop.f32.mrb[0].mxu0
      %v898 = vadd.f32 %v317, %v897
      %v899 = vpop.f32.mrb[0].mxu0
      %900 = vmatprep.mubr.bf16.mxu0 0
      %901 = vmatmul.mubr.bf16.gmra.mrb[0].mxu0 %v703
      %v902 = vpop.f32.mrb[0].mxu0
      %v903 = vadd.f32 %v322, %v902
      %v904 = vpop.f32.mrb[0].mxu0
      %v905 = vpop.f32.mrb[0].mxu0
      %v906 = vadd.f32 %v327, %v905
      %v907 = vpop.f32.mrb[0].mxu0
      %908 = vmatprep.mubr.bf16.mxu0 0
      %909 = vmatmul.mubr.bf16.gmra.mrb[0].mxu0 %v706
      %v910 = vpop.f32.mrb[0].mxu0
      %v911 = vadd.f32 %v332, %v910
      %v912 = vpop.f32.mrb[0].mxu0
      %v913 = vpop.f32.mrb[0].mxu0
      %v914 = vadd.f32 %v337, %v913
      %v915 = vpop.f32.mrb[0].mxu0
      %916 = vmatprep.mubr.bf16.mxu0 0
      %917 = vmatmul.mubr.bf16.gmra.mrb[0].mxu0 %v709
      %v918 = vpop.f32.mrb[0].mxu0
      %v919 = vadd.f32 %v342, %v918
      %v920 = vpop.f32.mrb[0].mxu0
      %v921 = vpop.f32.mrb[0].mxu0
      %v922 = vadd.f32 %v347, %v921
      %v923 = vpop.f32.mrb[0].mxu0
      %924 = vmatprep.mubr.bf16.mxu0 0
      %925 = vmatmul.mubr.bf16.gmra.mrb[0].mxu0 %v712
      %v926 = vpop.f32.mrb[0].mxu0
      %v927 = vadd.f32 %v352, %v926
      %v928 = vpop.f32.mrb[0].mxu0
      %v929 = vpop.f32.mrb[0].mxu0
      %v930 = vadd.f32 %v357, %v929
      %v931 = vpop.f32.mrb[0].mxu0
      %932 = vmatprep.mubr.bf16.mxu0 0
      %933 = vmatmul.mubr.bf16.gmra.mrb[0].mxu0 %v715
      %v934 = vpop.f32.mrb[0].mxu0
      %v935 = vadd.f32 %v362, %v934
      %v936 = vpop.f32.mrb[0].mxu0
      %v937 = vpop.f32.mrb[0].mxu0
      %v938 = vadd.f32 %v367, %v937
      %v939 = vpop.f32.mrb[0].mxu0
      %940 = vmatprep.mubr.bf16.mxu0 0
      %941 = vmatmul.mubr.bf16.gmra.mrb[0].mxu0 %v718
      %v942 = vpop.f32.mrb[0].mxu0
      %v943 = vadd.f32 %v372, %v942
      %v944 = vpop.f32.mrb[0].mxu0
      %v945 = vpop.f32.mrb[0].mxu0
      %v946 = vadd.f32 %v377, %v945
      %v947 = vpop.f32.mrb[0].mxu0
      %948 = vmatprep.mubr.bf16.mxu0 0
      %949 = vmatmul.mubr.bf16.gmra.mrb[0].mxu0 %v721
      %v950 = vpop.f32.mrb[0].mxu0
      %v951 = vadd.f32 %v382, %v950
      %v952 = vpop.f32.mrb[0].mxu0
      %v953 = vpop.f32.mrb[0].mxu0
      %v954 = vadd.f32 %v387, %v953
      %v955 = vpop.f32.mrb[0].mxu0
      %956 = vmatprep.mubr.bf16.mxu0 0
      %957 = vmatmul.mubr.bf16.gmra.mrb[0].mxu0 %v724
      %v958 = vpop.f32.mrb[0].mxu0
      %v959 = vadd.f32 %v392, %v958
      %v960 = vpop.f32.mrb[0].mxu0
      %v961 = vpop.f32.mrb[0].mxu0
      %v962 = vadd.f32 %v397, %v961
      %v963 = vpop.f32.mrb[0].mxu0
      %964 = vmatprep.mubr.bf16.mxu0 0
      %965 = vmatmul.mubr.bf16.gmra.mrb[0].mxu0 %v727
      %v966 = vpop.f32.mrb[0].mxu0
      %v967 = vadd.f32 %v402, %v966
      %v968 = vpop.f32.mrb[0].mxu0
      %v969 = vpop.f32.mrb[0].mxu0
      %v970 = vadd.f32 %v407, %v969
      %v971 = vpop.f32.mrb[0].mxu0
      %972 = vmatprep.mubr.bf16.mxu0 0
      %973 = vmatmul.mubr.bf16.gmra.mrb[0].mxu0 %v730
      %v974 = vpop.f32.mrb[0].mxu0
      %v975 = vadd.f32 %v412, %v974
      %v976 = vpop.f32.mrb[0].mxu0
      %v977 = vpop.f32.mrb[0].mxu0
      %v978 = vadd.f32 %v417, %v977
      %v979 = vpop.f32.mrb[0].mxu0
      %980 = vmatprep.mubr.bf16.mxu0 0
      %981 = vmatmul.mubr.bf16.gmra.mrb[0].mxu0 %v733
      %v982 = vpop.f32.mrb[0].mxu0
      %v983 = vadd.f32 %v422, %v982
      %v984 = vpop.f32.mrb[0].mxu0
      %v985 = vpop.f32.mrb[0].mxu0
      %v986 = vadd.f32 %v427, %v985
      %v987 = vpop.f32.mrb[0].mxu0
      %988 = vmatprep.mubr.bf16.mxu0 0
      %989 = vmatmul.mubr.bf16.gmra.mrb[0].mxu0 %v736
      %v990 = vpop.f32.mrb[0].mxu0
      %v991 = vadd.f32 %v432, %v990
      %v992 = vpop.f32.mrb[0].mxu0
      %v993 = vpop.f32.mrb[0].mxu0
      %v994 = vadd.f32 %v437, %v993
      %v995 = vpop.f32.mrb[0].mxu0
      %996 = vmatprep.mubr.bf16.mxu0 0
      %997 = vmatmul.mubr.bf16.gmra.mrb[0].mxu0 %v739
      %v998 = vpop.f32.mrb[0].mxu0
      %v999 = vadd.f32 %v442, %v998
      %v1000 = vpop.f32.mrb[0].mxu0
      %v1001 = vpop.f32.mrb[0].mxu0
      %v1002 = vadd.f32 %v447, %v1001
      %v1003 = vpop.f32.mrb[0].mxu0
      %1004 = vmatprep.mubr.bf16.mxu0 0
      %1005 = vmatmul.mubr.bf16.gmra.mrb[0].mxu0 %v742
      %v1006 = vpop.f32.mrb[0].mxu0
      %v1007 = vadd.f32 %v452, %v1006
      %v1008 = vpop.f32.mrb[0].mxu0
      %v1009 = vpop.f32.mrb[0].mxu0
      %v1010 = vadd.f32 %v457, %v1009
      %v1011 = vpop.f32.mrb[0].mxu0
      %1012 = vmatprep.mubr.bf16.mxu0 0
      %1013 = vmatmul.mubr.bf16.gmra.mrb[0].mxu0 %v745
      %v1014 = vpop.f32.mrb[0].mxu0
      %v1015 = vadd.f32 %v462, %v1014
      %v1016 = vpop.f32.mrb[0].mxu0
      %v1017 = vpop.f32.mrb[0].mxu0
      %v1018 = vadd.f32 %v467, %v1017
      %v1019 = vpop.f32.mrb[0].mxu0
      %1020 = vmatprep.mubr.bf16.mxu0 0
      %1021 = vmatmul.mubr.bf16.gmra.mrb[0].mxu0 %v748
      %v1022 = vpop.f32.mrb[0].mxu0
      %v1023 = vadd.f32 %v472, %v1022
      %v1024 = vpop.f32.mrb[0].mxu0
      %v1025 = vpop.f32.mrb[0].mxu0
      %v1026 = vadd.f32 %v477, %v1025
      %v1027 = vpop.f32.mrb[0].mxu0
      %1028 = vmatprep.mubr.bf16.mxu0 0
      %1029 = vmatmul.mubr.bf16.gmra.mrb[0].mxu0 %v751
      %v1030 = vpop.f32.mrb[0].mxu0
      %v1031 = vadd.f32 %v482, %v1030
      %v1032 = vpop.f32.mrb[0].mxu0
      %v1033 = vpop.f32.mrb[0].mxu0
      %v1034 = vadd.f32 %v487, %v1033
      %v1035 = vpop.f32.mrb[0].mxu0
      %1036 = vmatprep.mubr.bf16.mxu0 0
      %1037 = vmatmul.mubr.bf16.gmra.mrb[0].mxu0 %v754
      %v1038 = vpop.f32.mrb[0].mxu0
      %v1039 = vadd.f32 %v492, %v1038
      %v1040 = vpop.f32.mrb[0].mxu0
      %v1041 = vpop.f32.mrb[0].mxu0
      %v1042 = vadd.f32 %v497, %v1041
      %v1043 = vpop.f32.mrb[0].mxu0
      %1044 = vdwg.mxu0
      %v1045 = vmax.f32 %v791, 0.0
      %v1046 = vmax.f32 %v794, 0.0
      %v1047 = vmax.f32 %v799, 0.0
      %v1048 = vmax.f32 %v802, 0.0
      %v1049 = vmax.f32 %v807, 0.0
      %v1050 = vmax.f32 %v810, 0.0
      %v1051 = vmax.f32 %v815, 0.0
      %v1052 = vmax.f32 %v818, 0.0
      %v1053 = vmax.f32 %v823, 0.0
      %v1054 = vmax.f32 %v826, 0.0
      %v1055 = vmax.f32 %v831, 0.0
      %v1056 = vmax.f32 %v834, 0.0
      %v1057 = vmax.f32 %v839, 0.0
      %v1058 = vmax.f32 %v842, 0.0
      %v1059 = vmax.f32 %v847, 0.0
      %v1060 = vmax.f32 %v850, 0.0
      %v1061 = vmax.f32 %v855, 0.0
      %v1062 = vmax.f32 %v858, 0.0
      %v1063 = vmax.f32 %v863, 0.0
      %v1064 = vmax.f32 %v866, 0.0
      %v1065 = vmax.f32 %v871, 0.0
      %v1066 = vmax.f32 %v874, 0.0
      %v1067 = vmax.f32 %v879, 0.0
      %v1068 = vmax.f32 %v882, 0.0
      %v1069 = vmax.f32 %v887, 0.0
      %v1070 = vmax.f32 %v890, 0.0
      %v1071 = vmax.f32 %v895, 0.0
      %v1072 = vmax.f32 %v898, 0.0
      %v1073 = vmax.f32 %v903, 0.0
      %v1074 = vmax.f32 %v906, 0.0
      %v1075 = vmax.f32 %v911, 0.0
      %v1076 = vmax.f32 %v914, 0.0
      %v1077 = vmax.f32 %v919, 0.0
      %v1078 = vmax.f32 %v922, 0.0
      %v1079 = vmax.f32 %v927, 0.0
      %v1080 = vmax.f32 %v930, 0.0
      %v1081 = vmax.f32 %v935, 0.0
      %v1082 = vmax.f32 %v938, 0.0
      %v1083 = vmax.f32 %v943, 0.0
      %v1084 = vmax.f32 %v946, 0.0
      %v1085 = vmax.f32 %v951, 0.0
      %v1086 = vmax.f32 %v954, 0.0
      %v1087 = vmax.f32 %v959, 0.0
      %v1088 = vmax.f32 %v962, 0.0
      %v1089 = vmax.f32 %v967, 0.0
      %v1090 = vmax.f32 %v970, 0.0
      %v1091 = vmax.f32 %v975, 0.0
      %v1092 = vmax.f32 %v978, 0.0
      %v1093 = vmax.f32 %v983, 0.0
      %v1094 = vmax.f32 %v986, 0.0
      %v1095 = vmax.f32 %v991, 0.0
      %v1096 = vmax.f32 %v994, 0.0
      %v1097 = vmax.f32 %v999, 0.0
      %v1098 = vmax.f32 %v1002, 0.0
      %v1099 = vmax.f32 %v1007, 0.0
      %v1100 = vmax.f32 %v1010, 0.0
      %v1101 = vmax.f32 %v1015, 0.0
      %v1102 = vmax.f32 %v1018, 0.0
      %v1103 = vmax.f32 %v1023, 0.0
      %v1104 = vmax.f32 %v1026, 0.0
      %v1105 = vmax.f32 %v1031, 0.0
      %v1106 = vmax.f32 %v1034, 0.0
      %v1107 = vmax.f32 %v1039, 0.0
      %v1108 = vmax.f32 %v1042, 0.0
      %v1109 = vpack.c.bf16 %v1046, %v1045
      %v1110 = vpack.c.bf16 %v1048, %v1047
      %v1111 = vpack.c.bf16 %v1050, %v1049
      %v1112 = vpack.c.bf16 %v1052, %v1051
      %v1113 = vpack.c.bf16 %v1054, %v1053
      %v1114 = vpack.c.bf16 %v1056, %v1055
      %v1115 = vpack.c.bf16 %v1058, %v1057
      %v1116 = vpack.c.bf16 %v1060, %v1059
      %v1117 = vpack.c.bf16 %v1062, %v1061
      %v1118 = vpack.c.bf16 %v1064, %v1063
      %v1119 = vpack.c.bf16 %v1066, %v1065
      %v1120 = vpack.c.bf16 %v1068, %v1067
      %v1121 = vpack.c.bf16 %v1070, %v1069
      %v1122 = vpack.c.bf16 %v1072, %v1071
      %v1123 = vpack.c.bf16 %v1074, %v1073
      %v1124 = vpack.c.bf16 %v1076, %v1075
      %v1125 = vpack.c.bf16 %v1078, %v1077
      %v1126 = vpack.c.bf16 %v1080, %v1079
      %v1127 = vpack.c.bf16 %v1082, %v1081
      %v1128 = vpack.c.bf16 %v1084, %v1083
      %v1129 = vpack.c.bf16 %v1086, %v1085
      %v1130 = vpack.c.bf16 %v1088, %v1087
      %v1131 = vpack.c.bf16 %v1090, %v1089
      %v1132 = vpack.c.bf16 %v1092, %v1091
      %v1133 = vpack.c.bf16 %v1094, %v1093
      %v1134 = vpack.c.bf16 %v1096, %v1095
      %v1135 = vpack.c.bf16 %v1098, %v1097
      %v1136 = vpack.c.bf16 %v1100, %v1099
      %v1137 = vpack.c.bf16 %v1102, %v1101
      %v1138 = vpack.c.bf16 %v1104, %v1103
      %v1139 = vpack.c.bf16 %v1106, %v1105
      %v1140 = vpack.c.bf16 %v1108, %v1107
      %v1141 = vld [vmem:[#allocation2] sm:$0xff]
      %v1142 = vld [vmem:[#allocation2 + $0x8] sm:$0xff]
      %v1147 = vunpack.c.l.b16 %v175
      %v1148 = vunpack.c.h.b16 %v175
      %v1149 = vunpack.c.l.b16 %v176
      %v1150 = vunpack.c.h.b16 %v176
      %v1151 = vunpack.c.l.b16 %v177
      %v1152 = vunpack.c.h.b16 %v177
      %v1153 = vunpack.c.l.b16 %v178
      %v1154 = vunpack.c.h.b16 %v178
      %v1155 = vpack.c.b16 %v1151, %v1147
      %v1156 = vpack.c.b16 %v1152, %v1148
      %v1157 = vpack.c.b16 %v1153, %v1149
      %v1158 = vpack.c.b16 %v1154, %v1150
      %1163 = vmatprep.subr.bf16.mxu0 0
      %1164 = vmatpush1.bf16.msra.mxu0 %v1109
      %1165 = vmatprep.subr.bf16.mxu0 0
      %1166 = vmatpush1.bf16.msra.mxu0 %v1110
      %1167 = vmatprep.subr.bf16.mxu0 0
      %1168 = vmatpush1.bf16.msra.mxu0 %v1111
      %1169 = vmatprep.subr.bf16.mxu0 0
      %1170 = vmatpush1.bf16.msra.mxu0 %v1112
      %1171 = vmatprep.subr.bf16.mxu0 0
      %1172 = vmatpush1.bf16.msra.mxu0 %v1113
      %1173 = vmatprep.subr.bf16.mxu0 0
      %1174 = vmatpush1.bf16.msra.mxu0 %v1114
      %1175 = vmatprep.subr.bf16.mxu0 0
      %1176 = vmatpush1.bf16.msra.mxu0 %v1115
      %1177 = vmatprep.subr.bf16.mxu0 0
      %1178 = vmatpush1.bf16.msra.mxu0 %v1116
      %1179 = vmatprep.subr.bf16.mxu0 0
      %1180 = vmatpush1.bf16.msra.mxu0 %v1117
      %1181 = vmatprep.subr.bf16.mxu0 0
      %1182 = vmatpush1.bf16.msra.mxu0 %v1118
      %1183 = vmatprep.subr.bf16.mxu0 0
      %1184 = vmatpush1.bf16.msra.mxu0 %v1119
      %1185 = vmatprep.subr.bf16.mxu0 0
      %1186 = vmatpush1.bf16.msra.mxu0 %v1120
      %1187 = vmatprep.subr.bf16.mxu0 0
      %1188 = vmatpush1.bf16.msra.mxu0 %v1121
      %1189 = vmatprep.subr.bf16.mxu0 0
      %1190 = vmatpush1.bf16.msra.mxu0 %v1122
      %1191 = vmatprep.subr.bf16.mxu0 0
      %1192 = vmatpush1.bf16.msra.mxu0 %v1123
      %1193 = vmatprep.subr.bf16.mxu0 0
      %1194 = vmatpush1.bf16.msra.mxu0 %v1124
      %1195 = vmatprep.mubr.bf16.mxu0 %v1156
      %1196 = vmatmul.mubr.bf16.gmra.mrb[0].mxu0 %v1155
      %v1197 = vpop.f32.mrb[0].mxu0
      %v1198 = vadd.f32 0.0, %v1197
      %v1199 = vpop.f32.mrb[0].mxu0
      %v1200 = vpop.f32.mrb[0].mxu0
      %v1201 = vadd.f32 0.0, %v1200
      %v1202 = vpop.f32.mrb[0].mxu0
      %1203 = vdwg.mxu0
      %1204 = vmatprep.subr.bf16.mxu0 0
      %1205 = vmatpush1.bf16.msra.mxu0 %v1125
      %1206 = vmatprep.subr.bf16.mxu0 0
      %1207 = vmatpush1.bf16.msra.mxu0 %v1126
      %1208 = vmatprep.subr.bf16.mxu0 0
      %1209 = vmatpush1.bf16.msra.mxu0 %v1127
      %1210 = vmatprep.subr.bf16.mxu0 0
      %1211 = vmatpush1.bf16.msra.mxu0 %v1128
      %1212 = vmatprep.subr.bf16.mxu0 0
      %1213 = vmatpush1.bf16.msra.mxu0 %v1129
      %1214 = vmatprep.subr.bf16.mxu0 0
      %1215 = vmatpush1.bf16.msra.mxu0 %v1130
      %1216 = vmatprep.subr.bf16.mxu0 0
      %1217 = vmatpush1.bf16.msra.mxu0 %v1131
      %1218 = vmatprep.subr.bf16.mxu0 0
      %1219 = vmatpush1.bf16.msra.mxu0 %v1132
      %1220 = vmatprep.subr.bf16.mxu0 0
      %1221 = vmatpush1.bf16.msra.mxu0 %v1133
      %1222 = vmatprep.subr.bf16.mxu0 0
      %1223 = vmatpush1.bf16.msra.mxu0 %v1134
      %1224 = vmatprep.subr.bf16.mxu0 0
      %1225 = vmatpush1.bf16.msra.mxu0 %v1135
      %1226 = vmatprep.subr.bf16.mxu0 0
      %1227 = vmatpush1.bf16.msra.mxu0 %v1136
      %1228 = vmatprep.subr.bf16.mxu0 0
      %1229 = vmatpush1.bf16.msra.mxu0 %v1137
      %1230 = vmatprep.subr.bf16.mxu0 0
      %1231 = vmatpush1.bf16.msra.mxu0 %v1138
      %1232 = vmatprep.subr.bf16.mxu0 0
      %1233 = vmatpush1.bf16.msra.mxu0 %v1139
      %1234 = vmatprep.subr.bf16.mxu0 0
      %1235 = vmatpush1.bf16.msra.mxu0 %v1140
      %1236 = vmatprep.mubr.bf16.mxu0 %v1158
      %1237 = vmatmul.mubr.bf16.gmra.mrb[0].mxu0 %v1157
      %v1238 = vpop.f32.mrb[0].mxu0
      %v1239 = vadd.f32 %v1198, %v1238
      %v1240 = vpop.f32.mrb[0].mxu0
      %v1241 = vpop.f32.mrb[0].mxu0
      %v1242 = vadd.f32 %v1201, %v1241
      %v1243 = vpop.f32.mrb[0].mxu0
      %1244 = vdwg.mxu0
      %v1245 = vadd.f32 %v1141, %v1239
      %v1246 = vadd.f32 %v1142, %v1242
      %1247 = vst [vmem:[#allocation2] sm:$0xff] %v1245
      %1248 = vst [vmem:[#allocation2 + $0x8] sm:$0xff] %v1246
    $region34: #{tpu_custom_call.1} parent=1 // loop_footer
      %s38 = sadd.s32 1, %s34
    $region35: #{tpu_custom_call.1} parent=1 // loop_footer_branch
      %33 = sbr.rel target = $region31
    $region36: #{tpu_custom_call.1} parent=1 // loop_exit
      _
    %v1249 = vld [vmem:[#allocation2] sm:$0xff]
    %v1250 = vld [vmem:[#allocation2 + $0x8] sm:$0xff]
    %v1251 = vld [vmem:[%s4] sm:$0xff]
    %v1252 = vld [vmem:[%s4 + $0x8] sm:$0xff]
    %1254 = vset.pattern.permute.xlu0 0
    %1255 = vperm.xlu0 %1254, %v1251
    %v1256 = vpop.permute.xlu0 %1255
    %1259 = vset.pattern.permute.xlu0 0
    %1260 = vperm.xlu0 %1259, %v1252
    %v1261 = vpop.permute.xlu0 %1260
    %v1263 = vadd.f32 %v1249, %v1256
    %v1264 = vadd.f32 %v1250, %v1261
    %v1265 = vadd.f32 %v1263, %v28
    %v1266 = vadd.f32 %v1264, %v29
    %v1267 = vadd.f32 %v1265, %v1266
    %v1268 = vrot.slane %v1267, 4
    %v1269 = vadd.f32 %v1267, %v1268
    %v1270 = vrot.slane %v1269, 2
    %v1271 = vadd.f32 %v1269, %v1270
    %v1272 = vrot.slane %v1271, 1
    %v1273 = vadd.f32 %v1271, %v1272
    %v1274 = vrcp.pop 16.0
    %v1275 = vmul.f32 %v1273, %v1274
    %v1276 = vsub.f32 %v1265, %v1275
    %v1277 = vsub.f32 %v1266, %v1275
    %v1278 = vmul.f32 %v1276, %v1276
    %v1279 = vmul.f32 %v1277, %v1277
    %v1280 = vadd.f32 %v1278, %v1279
    %v1281 = vrot.slane %v1280, 4
    %v1282 = vadd.f32 %v1280, %v1281
    %v1283 = vrot.slane %v1282, 2
    %v1284 = vadd.f32 %v1282, %v1283
    %v1285 = vrot.slane %v1284, 1
    %v1286 = vadd.f32 %v1284, %v1285
    %v1287 = vmul.f32 %v1286, %v1274
    %v1288 = vadd.f32 %v1287, 1e-05
    %v1289 = vrsqrt.pop %v1288
    %v1290 = vmul.f32 %v1276, %v1289
    %v1291 = vmul.f32 %v1277, %v1289
    %v1292 = vld [vmem:[%s5] sm:$0xff]
    %v1293 = vld [vmem:[%s5 + $0x8] sm:$0xff]
    %1295 = vset.pattern.permute.xlu0 0
    %1296 = vperm.xlu0 %1295, %v1292
    %v1297 = vpop.permute.xlu0 %1296
    %1300 = vset.pattern.permute.xlu0 0
    %1301 = vperm.xlu0 %1300, %v1293
    %v1302 = vpop.permute.xlu0 %1301
    %v1304 = vmul.f32 %v1290, %v1297
    %v1305 = vmul.f32 %v1291, %v1302
    %v1306 = vld [vmem:[%s6] sm:$0xff]
    %v1307 = vld [vmem:[%s6 + $0x8] sm:$0xff]
    %1309 = vset.pattern.permute.xlu0 0
    %1310 = vperm.xlu0 %1309, %v1306
    %v1311 = vpop.permute.xlu0 %1310
    %1314 = vset.pattern.permute.xlu0 0
    %1315 = vperm.xlu0 %1314, %v1307
    %v1316 = vpop.permute.xlu0 %1315
    %v1318 = vadd.f32 %v1304, %v1311
    %v1319 = vadd.f32 %v1305, %v1316
    %1320 = vst [vmem:[#allocation3] sm:$0xff] %v1318
    %1321 = vst [vmem:[#allocation3 + $0x8] sm:$0xff] %v1319
    // Predicated region
    $region37: #{tpu_custom_call.1} parent=1 // pred_check
      _
    $region38: #{tpu_custom_call.1} parent=1 // pred_check_branch
      %1323 = sbr.rel (0) target = $region40
    $region39: #{tpu_custom_call.1} parent=1 // pred_region
      %s1325 = ssub.s32 256, 256
      %1326 = vsyncadd [#allocation4], %s1325
      %s1327 = sshll.u32 [#allocation3], 4
      %s1328 = int_to_ptr.vmem [resolvable:$true] %s1327
      %1333 = dma.vmem_to_hbm [thread:$0]  %s1328, 256, %s7, [#allocation4], 128, 128, 8
    $region40: #{tpu_custom_call.1} parent=1 // pred_fallthru
      _
    // Predicated region
    $region41: #{tpu_custom_call.1} parent=1 // pred_check
      _
    $region42: #{tpu_custom_call.1} parent=1 // pred_check_branch
      %1335 = sbr.rel (0) target = $region44
    $region43: #{tpu_custom_call.1} parent=1 // pred_region
      %1336 = dma.done [#allocation4], 256
    $region44: #{tpu_custom_call.1} parent=1 // pred_fallthru
      _
    %1337 = vsyncpa [#allocation4], 1

</llo_original>
